<compile_context>
chip_gen: v7x
topology: tpu7x:2x2x1
jax: 0.10.0
libtpu: 0.0.40
codegen_flags: <defaults>
</compile_context>

<pallas_src>
import functools

import jax
import jax.numpy as jnp
from jax import lax
from jax.experimental import pallas as pl
from jax.experimental.pallas import tpu as pltpu


def _rnn_kernel(x_ref, wih_ref, whh_ref, b_ref, wout_ref, bout_ref, out_ref,
                *, seq_len, batch, hidden_dim):
    """LSTM recurrence + final Linear + LogSoftmax in one kernel.

    x_ref    : (T*B, F)  bfloat16, time-major rows (row t*B+b = step t, batch b)
    wih_ref  : (F, 4H)   bfloat16
    whh_ref  : (H, 4H)   bfloat16
    b_ref    : (1, 4H)   float32   (b_ih + b_hh)
    wout_ref : (H, C)    float32
    bout_ref : (1, C)    float32
    out_ref  : (B, C)    float32   log-probabilities
    """
    T, B, H = seq_len, batch, hidden_dim

    w_ih = wih_ref[...]                                    # (F, 4H) bf16
    bias = b_ref[...]                                      # (1, 4H) f32

    # ---- Hoisted input projection, split so the step-0 gate math (which ----
    # ---- needs no recurrent matmul) can overlap the larger second matmul. --
    gx0 = (jnp.dot(x_ref[0:B, :], w_ih,
                   preferred_element_type=jnp.float32) + bias)        # (B, 4H)
    gx_rest = (jnp.dot(x_ref[B:T * B, :], w_ih,
                       preferred_element_type=jnp.float32) + bias)    # ((T-1)*B, 4H)

    w_hh = whh_ref[...]                                    # (H, 4H) bf16

    # Lane-constant vectors implementing tanh(x) = 2*sigmoid(2x) - 1 on the
    # "g" gate lanes [2H, 3H) with a single full-vreg sigmoid pass:
    #   i/f/o lanes: sigmoid(x)         (pre=1, post=1, shift= 0)
    #   g lanes    : 2*sigmoid(2x) - 1  (pre=2, post=2, shift=-1)
    lane = lax.broadcasted_iota(jnp.int32, (B, 4 * H), 1)
    g_mask = (lane >= 2 * H) & (lane < 3 * H)
    pre = jnp.where(g_mask, 2.0, 1.0).astype(jnp.float32)
    post = pre
    shift = jnp.where(g_mask, -1.0, 0.0).astype(jnp.float32)

    def activations(gates):
        return jax.nn.sigmoid(gates * pre) * post + shift

    # ---- Step 0: h == c == 0 -> no recurrent matmul, no f*c term. ----
    act = activations(gx0)
    i_g = act[:, 0 * H:1 * H]
    g_g = act[:, 2 * H:3 * H]
    o_g = act[:, 3 * H:4 * H]
    c = i_g * g_g
    h = o_g * jnp.tanh(c)

    # ---- Steps 1..T-1: one small bf16 matmul + ONE sigmoid pass each. ----
    for t in range(1, T):
        gx_t = gx_rest[(t - 1) * B:t * B, :]               # (B, 4H), contiguous
        gates = gx_t + jnp.dot(h.astype(jnp.bfloat16), w_hh,
                               preferred_element_type=jnp.float32)
        act = activations(gates)
        i_g = act[:, 0 * H:1 * H]
        f_g = act[:, 1 * H:2 * H]
        g_g = act[:, 2 * H:3 * H]
        o_g = act[:, 3 * H:4 * H]
        c = f_g * c + i_g * g_g
        h = o_g * jnp.tanh(c)

    # ---- mlp_1: Linear(H -> C) on the final hidden state (f32, tiny). ----
    logits = (jnp.dot(h, wout_ref[...], preferred_element_type=jnp.float32)
              + bout_ref[...])                             # (B, C)

    # ---- LogSoftmax(dim=1), numerically stabilized. ----
    m = jnp.max(logits, axis=-1, keepdims=True)
    shifted = logits - m
    lse = jnp.log(jnp.sum(jnp.exp(shifted), axis=-1, keepdims=True))
    out_ref[...] = shifted - lse


def rnn_forward(x_btf, w_ih, w_hh, b_ih, b_hh, w_out, b_out):
    """x_btf: (batch, seq, in_features), weights in PyTorch layout."""
    B, T, F = x_btf.shape
    H = w_hh.shape[1]
    C = w_out.shape[0]

    # Glue (plain JAX, fuses into a couple of tiny XLA ops):
    # time-major + flattened rows so per-step gate rows are contiguous in-kernel.
    x_2d = jnp.transpose(x_btf, (1, 0, 2)).reshape(T * B, F).astype(jnp.bfloat16)
    wih_t = jnp.transpose(w_ih).astype(jnp.bfloat16)               # (F, 4H)
    whh_t = jnp.transpose(w_hh).astype(jnp.bfloat16)               # (H, 4H)
    bias = (b_ih + b_hh).reshape(1, 4 * H).astype(jnp.float32)     # (1, 4H)
    wout_t = jnp.transpose(w_out).astype(jnp.float32)              # (H, C)
    bout = b_out.reshape(1, C).astype(jnp.float32)                 # (1, C)

    kernel = functools.partial(_rnn_kernel, seq_len=T, batch=B, hidden_dim=H)
    vmem = pl.BlockSpec(memory_space=pltpu.MemorySpace.VMEM)
    return pl.pallas_call(
        kernel,
        out_shape=jax.ShapeDtypeStruct((B, C), jnp.float32),
        in_specs=[vmem] * 6,
        out_specs=vmem,
    )(x_2d, wih_t, whh_t, bias, wout_t, bout)


def _reference_forward(x_btf, w_ih, w_hh, b_ih, b_hh, w_out, b_out):
    """Pure-JAX f32 reference mirroring torch semantics (sanity check)."""
    B, T, F = x_btf.shape
    H = w_hh.shape[1]
    h = jnp.zeros((B, H), jnp.float32)
    c = jnp.zeros((B, H), jnp.float32)
    for t in range(T):
        gates = x_btf[:, t, :] @ w_ih.T + b_ih + h @ w_hh.T + b_hh
        i_g = jax.nn.sigmoid(gates[:, 0 * H:1 * H])
        f_g = jax.nn.sigmoid(gates[:, 1 * H:2 * H])
        g_g = jnp.tanh(gates[:, 2 * H:3 * H])
        o_g = jax.nn.sigmoid(gates[:, 3 * H:4 * H])
        c = f_g * c + i_g * g_g
        h = o_g * jnp.tanh(c)
    logits = h @ w_out.T + b_out
    return jax.nn.log_softmax(logits, axis=1)


if __name__ == "__main__":
    batch, seq, in_features = 8, 8, 16
    hidden_dim, num_classes = 32, 8

    key = jax.random.PRNGKey(0)
    ks = jax.random.split(key, 7)

    k_lstm = 1.0 / jnp.sqrt(hidden_dim)
    w_ih = jax.random.uniform(ks[0], (4 * hidden_dim, in_features),
                              jnp.float32, -k_lstm, k_lstm)
    w_hh = jax.random.uniform(ks[1], (4 * hidden_dim, hidden_dim),
                              jnp.float32, -k_lstm, k_lstm)
    b_ih = jax.random.uniform(ks[2], (4 * hidden_dim,),
                              jnp.float32, -k_lstm, k_lstm)
    b_hh = jax.random.uniform(ks[3], (4 * hidden_dim,),
                              jnp.float32, -k_lstm, k_lstm)
    k_lin = 1.0 / jnp.sqrt(hidden_dim)
    w_out = jax.random.uniform(ks[4], (num_classes, hidden_dim),
                               jnp.float32, -k_lin, k_lin)
    b_out = jax.random.uniform(ks[5], (num_classes,),
                               jnp.float32, -k_lin, k_lin)

    x = jax.random.normal(ks[6], (batch, seq, in_features), jnp.float32)

    out = rnn_forward(x, w_ih, w_hh, b_ih, b_hh, w_out, b_out)
    out = jax.block_until_ready(out)

    ref = _reference_forward(x, w_ih, w_hh, b_ih, b_hh, w_out, b_out)
    assert out.shape == (batch, num_classes)
    # Tolerance loosened vs. the f32 reference because MXU operands are bf16.
    assert jnp.allclose(out, ref, atol=5e-2, rtol=5e-2)

    print("KERNEL_OK")
</pallas_src>

<mosaic_0001>
module attributes {stable_mosaic.version = 11 : i64} {
  func.func @_rnn_kernel(%arg0: memref<64x16xbf16, #tpu.memory_space<vmem>>, %arg1: memref<16x128xbf16, #tpu.memory_space<vmem>>, %arg2: memref<32x128xbf16, #tpu.memory_space<vmem>>, %arg3: memref<1x128xf32, #tpu.memory_space<vmem>>, %arg4: memref<32x8xf32, #tpu.memory_space<vmem>>, %arg5: memref<1x8xf32, #tpu.memory_space<vmem>>, %arg6: memref<8x8xf32, #tpu.memory_space<vmem>>) attributes {dimension_semantics = [], scalar_prefetch = 0 : i64, scratch_operands = 0 : i64, tpu.core_type = #tpu.core_type<tc>} {
    %c0 = arith.constant 0 : index
    %c0_0 = arith.constant 0 : index
    %0 = vector.load %arg1[%c0, %c0_0] : memref<16x128xbf16, #tpu.memory_space<vmem>>, vector<16x128xbf16>
    %c0_1 = arith.constant 0 : index
    %c0_2 = arith.constant 0 : index
    %1 = vector.load %arg3[%c0_1, %c0_2] : memref<1x128xf32, #tpu.memory_space<vmem>>, vector<1x128xf32>
    %c0_3 = arith.constant 0 : index
    %c0_4 = arith.constant 0 : index
    %2 = vector.load %arg0[%c0_3, %c0_4] : memref<64x16xbf16, #tpu.memory_space<vmem>>, vector<8x16xbf16>
    %cst = arith.constant dense<0.000000e+00> : vector<8x128xf32>
    %3 = tpu.matmul %2, %0, %cst {dimension_numbers = #tpu.dot_dimension_numbers<[1], [0], [0], [1], [0, 0, 1, 1], [], []>} : vector<8x16xbf16>, vector<16x128xbf16>, vector<8x128xf32> -> vector<8x128xf32>
    %4 = vector.broadcast %1 : vector<1x128xf32> to vector<8x128xf32>
    %5 = arith.addf %3, %4 : vector<8x128xf32>
    %c8 = arith.constant 8 : index
    %c0_5 = arith.constant 0 : index
    %6 = vector.load %arg0[%c8, %c0_5] : memref<64x16xbf16, #tpu.memory_space<vmem>>, vector<56x16xbf16>
    %cst_6 = arith.constant dense<0.000000e+00> : vector<56x128xf32>
    %7 = tpu.matmul %6, %0, %cst_6 {dimension_numbers = #tpu.dot_dimension_numbers<[1], [0], [0], [1], [0, 0, 1, 1], [], []>} : vector<56x16xbf16>, vector<16x128xbf16>, vector<56x128xf32> -> vector<56x128xf32>
    %8 = vector.broadcast %1 : vector<1x128xf32> to vector<56x128xf32>
    %9 = arith.addf %7, %8 : vector<56x128xf32>
    %c0_7 = arith.constant 0 : index
    %c0_8 = arith.constant 0 : index
    %10 = vector.load %arg2[%c0_7, %c0_8] : memref<32x128xbf16, #tpu.memory_space<vmem>>, vector<32x128xbf16>
    %11 = tpu.iota {dimensions = array<i32: 1>} : vector<8x128xi32>
    %c64_i32 = arith.constant 64 : i32
    %12 = vector.broadcast %c64_i32 : i32 to vector<8x128xi32>
    %13 = arith.cmpi sge, %11, %12 : vector<8x128xi32>
    %c96_i32 = arith.constant 96 : i32
    %14 = vector.broadcast %c96_i32 : i32 to vector<8x128xi32>
    %15 = arith.cmpi slt, %11, %14 : vector<8x128xi32>
    %16 = arith.andi %13, %15 : vector<8x128xi1>
    %cst_9 = arith.constant 2.000000e+00 : f32
    %cst_10 = arith.constant 1.000000e+00 : f32
    %17 = vector.broadcast %cst_9 : f32 to vector<8x128xf32>
    %18 = vector.broadcast %cst_10 : f32 to vector<8x128xf32>
    %19 = arith.select %16, %17, %18 : vector<8x128xi1>, vector<8x128xf32>
    %cst_11 = arith.constant -1.000000e+00 : f32
    %cst_12 = arith.constant 0.000000e+00 : f32
    %20 = vector.broadcast %cst_11 : f32 to vector<8x128xf32>
    %21 = vector.broadcast %cst_12 : f32 to vector<8x128xf32>
    %22 = arith.select %16, %20, %21 : vector<8x128xi1>, vector<8x128xf32>
    %23 = arith.mulf %5, %19 : vector<8x128xf32>
    %24 = arith.negf %23 : vector<8x128xf32>
    %25 = math.exp %24 : vector<8x128xf32>
    %cst_13 = arith.constant 1.000000e+00 : f32
    %26 = vector.broadcast %cst_13 : f32 to vector<8x128xf32>
    %27 = arith.addf %26, %25 : vector<8x128xf32>
    %28 = arith.divf %26, %27 : vector<8x128xf32>
    %29 = arith.mulf %28, %19 : vector<8x128xf32>
    %30 = arith.addf %29, %22 : vector<8x128xf32>
    %31 = vector.extract_strided_slice %30 {offsets = [0, 0], sizes = [8, 32], strides = [1, 1]} : vector<8x128xf32> to vector<8x32xf32>
    %32 = vector.extract_strided_slice %30 {offsets = [0, 64], sizes = [8, 32], strides = [1, 1]} : vector<8x128xf32> to vector<8x32xf32>
    %33 = vector.extract_strided_slice %30 {offsets = [0, 96], sizes = [8, 32], strides = [1, 1]} : vector<8x128xf32> to vector<8x32xf32>
    %34 = arith.mulf %31, %32 : vector<8x32xf32>
    %35 = math.tanh %34 : vector<8x32xf32>
    %36 = arith.mulf %33, %35 : vector<8x32xf32>
    %37 = vector.extract_strided_slice %9 {offsets = [0, 0], sizes = [8, 128], strides = [1, 1]} : vector<56x128xf32> to vector<8x128xf32>
    %38 = arith.truncf %36 : vector<8x32xf32> to vector<8x32xbf16>
    %cst_14 = arith.constant dense<0.000000e+00> : vector<8x128xf32>
    %39 = tpu.matmul %38, %10, %cst_14 {dimension_numbers = #tpu.dot_dimension_numbers<[1], [0], [0], [1], [0, 0, 1, 1], [], []>} : vector<8x32xbf16>, vector<32x128xbf16>, vector<8x128xf32> -> vector<8x128xf32>
    %40 = arith.addf %37, %39 : vector<8x128xf32>
    %41 = arith.mulf %40, %19 : vector<8x128xf32>
    %42 = arith.negf %41 : vector<8x128xf32>
    %43 = math.exp %42 : vector<8x128xf32>
    %cst_15 = arith.constant 1.000000e+00 : f32
    %44 = vector.broadcast %cst_15 : f32 to vector<8x128xf32>
    %45 = arith.addf %44, %43 : vector<8x128xf32>
    %46 = arith.divf %44, %45 : vector<8x128xf32>
    %47 = arith.mulf %46, %19 : vector<8x128xf32>
    %48 = arith.addf %47, %22 : vector<8x128xf32>
    %49 = vector.extract_strided_slice %48 {offsets = [0, 0], sizes = [8, 32], strides = [1, 1]} : vector<8x128xf32> to vector<8x32xf32>
    %50 = vector.extract_strided_slice %48 {offsets = [0, 32], sizes = [8, 32], strides = [1, 1]} : vector<8x128xf32> to vector<8x32xf32>
    %51 = vector.extract_strided_slice %48 {offsets = [0, 64], sizes = [8, 32], strides = [1, 1]} : vector<8x128xf32> to vector<8x32xf32>
    %52 = vector.extract_strided_slice %48 {offsets = [0, 96], sizes = [8, 32], strides = [1, 1]} : vector<8x128xf32> to vector<8x32xf32>
    %53 = arith.mulf %50, %34 : vector<8x32xf32>
    %54 = arith.mulf %49, %51 : vector<8x32xf32>
    %55 = arith.addf %53, %54 : vector<8x32xf32>
    %56 = math.tanh %55 : vector<8x32xf32>
    %57 = arith.mulf %52, %56 : vector<8x32xf32>
    %58 = vector.extract_strided_slice %9 {offsets = [8, 0], sizes = [8, 128], strides = [1, 1]} : vector<56x128xf32> to vector<8x128xf32>
    %59 = arith.truncf %57 : vector<8x32xf32> to vector<8x32xbf16>
    %cst_16 = arith.constant dense<0.000000e+00> : vector<8x128xf32>
    %60 = tpu.matmul %59, %10, %cst_16 {dimension_numbers = #tpu.dot_dimension_numbers<[1], [0], [0], [1], [0, 0, 1, 1], [], []>} : vector<8x32xbf16>, vector<32x128xbf16>, vector<8x128xf32> -> vector<8x128xf32>
    %61 = arith.addf %58, %60 : vector<8x128xf32>
    %62 = arith.mulf %61, %19 : vector<8x128xf32>
    %63 = arith.negf %62 : vector<8x128xf32>
    %64 = math.exp %63 : vector<8x128xf32>
    %cst_17 = arith.constant 1.000000e+00 : f32
    %65 = vector.broadcast %cst_17 : f32 to vector<8x128xf32>
    %66 = arith.addf %65, %64 : vector<8x128xf32>
    %67 = arith.divf %65, %66 : vector<8x128xf32>
    %68 = arith.mulf %67, %19 : vector<8x128xf32>
    %69 = arith.addf %68, %22 : vector<8x128xf32>
    %70 = vector.extract_strided_slice %69 {offsets = [0, 0], sizes = [8, 32], strides = [1, 1]} : vector<8x128xf32> to vector<8x32xf32>
    %71 = vector.extract_strided_slice %69 {offsets = [0, 32], sizes = [8, 32], strides = [1, 1]} : vector<8x128xf32> to vector<8x32xf32>
    %72 = vector.extract_strided_slice %69 {offsets = [0, 64], sizes = [8, 32], strides = [1, 1]} : vector<8x128xf32> to vector<8x32xf32>
    %73 = vector.extract_strided_slice %69 {offsets = [0, 96], sizes = [8, 32], strides = [1, 1]} : vector<8x128xf32> to vector<8x32xf32>
    %74 = arith.mulf %71, %55 : vector<8x32xf32>
    %75 = arith.mulf %70, %72 : vector<8x32xf32>
    %76 = arith.addf %74, %75 : vector<8x32xf32>
    %77 = math.tanh %76 : vector<8x32xf32>
    %78 = arith.mulf %73, %77 : vector<8x32xf32>
    %79 = vector.extract_strided_slice %9 {offsets = [16, 0], sizes = [8, 128], strides = [1, 1]} : vector<56x128xf32> to vector<8x128xf32>
    %80 = arith.truncf %78 : vector<8x32xf32> to vector<8x32xbf16>
    %cst_18 = arith.constant dense<0.000000e+00> : vector<8x128xf32>
    %81 = tpu.matmul %80, %10, %cst_18 {dimension_numbers = #tpu.dot_dimension_numbers<[1], [0], [0], [1], [0, 0, 1, 1], [], []>} : vector<8x32xbf16>, vector<32x128xbf16>, vector<8x128xf32> -> vector<8x128xf32>
    %82 = arith.addf %79, %81 : vector<8x128xf32>
    %83 = arith.mulf %82, %19 : vector<8x128xf32>
    %84 = arith.negf %83 : vector<8x128xf32>
    %85 = math.exp %84 : vector<8x128xf32>
    %cst_19 = arith.constant 1.000000e+00 : f32
    %86 = vector.broadcast %cst_19 : f32 to vector<8x128xf32>
    %87 = arith.addf %86, %85 : vector<8x128xf32>
    %88 = arith.divf %86, %87 : vector<8x128xf32>
    %89 = arith.mulf %88, %19 : vector<8x128xf32>
    %90 = arith.addf %89, %22 : vector<8x128xf32>
    %91 = vector.extract_strided_slice %90 {offsets = [0, 0], sizes = [8, 32], strides = [1, 1]} : vector<8x128xf32> to vector<8x32xf32>
    %92 = vector.extract_strided_slice %90 {offsets = [0, 32], sizes = [8, 32], strides = [1, 1]} : vector<8x128xf32> to vector<8x32xf32>
    %93 = vector.extract_strided_slice %90 {offsets = [0, 64], sizes = [8, 32], strides = [1, 1]} : vector<8x128xf32> to vector<8x32xf32>
    %94 = vector.extract_strided_slice %90 {offsets = [0, 96], sizes = [8, 32], strides = [1, 1]} : vector<8x128xf32> to vector<8x32xf32>
    %95 = arith.mulf %92, %76 : vector<8x32xf32>
    %96 = arith.mulf %91, %93 : vector<8x32xf32>
    %97 = arith.addf %95, %96 : vector<8x32xf32>
    %98 = math.tanh %97 : vector<8x32xf32>
    %99 = arith.mulf %94, %98 : vector<8x32xf32>
    %100 = vector.extract_strided_slice %9 {offsets = [24, 0], sizes = [8, 128], strides = [1, 1]} : vector<56x128xf32> to vector<8x128xf32>
    %101 = arith.truncf %99 : vector<8x32xf32> to vector<8x32xbf16>
    %cst_20 = arith.constant dense<0.000000e+00> : vector<8x128xf32>
    %102 = tpu.matmul %101, %10, %cst_20 {dimension_numbers = #tpu.dot_dimension_numbers<[1], [0], [0], [1], [0, 0, 1, 1], [], []>} : vector<8x32xbf16>, vector<32x128xbf16>, vector<8x128xf32> -> vector<8x128xf32>
    %103 = arith.addf %100, %102 : vector<8x128xf32>
    %104 = arith.mulf %103, %19 : vector<8x128xf32>
    %105 = arith.negf %104 : vector<8x128xf32>
    %106 = math.exp %105 : vector<8x128xf32>
    %cst_21 = arith.constant 1.000000e+00 : f32
    %107 = vector.broadcast %cst_21 : f32 to vector<8x128xf32>
    %108 = arith.addf %107, %106 : vector<8x128xf32>
    %109 = arith.divf %107, %108 : vector<8x128xf32>
    %110 = arith.mulf %109, %19 : vector<8x128xf32>
    %111 = arith.addf %110, %22 : vector<8x128xf32>
    %112 = vector.extract_strided_slice %111 {offsets = [0, 0], sizes = [8, 32], strides = [1, 1]} : vector<8x128xf32> to vector<8x32xf32>
    %113 = vector.extract_strided_slice %111 {offsets = [0, 32], sizes = [8, 32], strides = [1, 1]} : vector<8x128xf32> to vector<8x32xf32>
    %114 = vector.extract_strided_slice %111 {offsets = [0, 64], sizes = [8, 32], strides = [1, 1]} : vector<8x128xf32> to vector<8x32xf32>
    %115 = vector.extract_strided_slice %111 {offsets = [0, 96], sizes = [8, 32], strides = [1, 1]} : vector<8x128xf32> to vector<8x32xf32>
    %116 = arith.mulf %113, %97 : vector<8x32xf32>
    %117 = arith.mulf %112, %114 : vector<8x32xf32>
    %118 = arith.addf %116, %117 : vector<8x32xf32>
    %119 = math.tanh %118 : vector<8x32xf32>
    %120 = arith.mulf %115, %119 : vector<8x32xf32>
    %121 = vector.extract_strided_slice %9 {offsets = [32, 0], sizes = [8, 128], strides = [1, 1]} : vector<56x128xf32> to vector<8x128xf32>
    %122 = arith.truncf %120 : vector<8x32xf32> to vector<8x32xbf16>
    %cst_22 = arith.constant dense<0.000000e+00> : vector<8x128xf32>
    %123 = tpu.matmul %122, %10, %cst_22 {dimension_numbers = #tpu.dot_dimension_numbers<[1], [0], [0], [1], [0, 0, 1, 1], [], []>} : vector<8x32xbf16>, vector<32x128xbf16>, vector<8x128xf32> -> vector<8x128xf32>
    %124 = arith.addf %121, %123 : vector<8x128xf32>
    %125 = arith.mulf %124, %19 : vector<8x128xf32>
    %126 = arith.negf %125 : vector<8x128xf32>
    %127 = math.exp %126 : vector<8x128xf32>
    %cst_23 = arith.constant 1.000000e+00 : f32
    %128 = vector.broadcast %cst_23 : f32 to vector<8x128xf32>
    %129 = arith.addf %128, %127 : vector<8x128xf32>
    %130 = arith.divf %128, %129 : vector<8x128xf32>
    %131 = arith.mulf %130, %19 : vector<8x128xf32>
    %132 = arith.addf %131, %22 : vector<8x128xf32>
    %133 = vector.extract_strided_slice %132 {offsets = [0, 0], sizes = [8, 32], strides = [1, 1]} : vector<8x128xf32> to vector<8x32xf32>
    %134 = vector.extract_strided_slice %132 {offsets = [0, 32], sizes = [8, 32], strides = [1, 1]} : vector<8x128xf32> to vector<8x32xf32>
    %135 = vector.extract_strided_slice %132 {offsets = [0, 64], sizes = [8, 32], strides = [1, 1]} : vector<8x128xf32> to vector<8x32xf32>
    %136 = vector.extract_strided_slice %132 {offsets = [0, 96], sizes = [8, 32], strides = [1, 1]} : vector<8x128xf32> to vector<8x32xf32>
    %137 = arith.mulf %134, %118 : vector<8x32xf32>
    %138 = arith.mulf %133, %135 : vector<8x32xf32>
    %139 = arith.addf %137, %138 : vector<8x32xf32>
    %140 = math.tanh %139 : vector<8x32xf32>
    %141 = arith.mulf %136, %140 : vector<8x32xf32>
    %142 = vector.extract_strided_slice %9 {offsets = [40, 0], sizes = [8, 128], strides = [1, 1]} : vector<56x128xf32> to vector<8x128xf32>
    %143 = arith.truncf %141 : vector<8x32xf32> to vector<8x32xbf16>
    %cst_24 = arith.constant dense<0.000000e+00> : vector<8x128xf32>
    %144 = tpu.matmul %143, %10, %cst_24 {dimension_numbers = #tpu.dot_dimension_numbers<[1], [0], [0], [1], [0, 0, 1, 1], [], []>} : vector<8x32xbf16>, vector<32x128xbf16>, vector<8x128xf32> -> vector<8x128xf32>
    %145 = arith.addf %142, %144 : vector<8x128xf32>
    %146 = arith.mulf %145, %19 : vector<8x128xf32>
    %147 = arith.negf %146 : vector<8x128xf32>
    %148 = math.exp %147 : vector<8x128xf32>
    %cst_25 = arith.constant 1.000000e+00 : f32
    %149 = vector.broadcast %cst_25 : f32 to vector<8x128xf32>
    %150 = arith.addf %149, %148 : vector<8x128xf32>
    %151 = arith.divf %149, %150 : vector<8x128xf32>
    %152 = arith.mulf %151, %19 : vector<8x128xf32>
    %153 = arith.addf %152, %22 : vector<8x128xf32>
    %154 = vector.extract_strided_slice %153 {offsets = [0, 0], sizes = [8, 32], strides = [1, 1]} : vector<8x128xf32> to vector<8x32xf32>
    %155 = vector.extract_strided_slice %153 {offsets = [0, 32], sizes = [8, 32], strides = [1, 1]} : vector<8x128xf32> to vector<8x32xf32>
    %156 = vector.extract_strided_slice %153 {offsets = [0, 64], sizes = [8, 32], strides = [1, 1]} : vector<8x128xf32> to vector<8x32xf32>
    %157 = vector.extract_strided_slice %153 {offsets = [0, 96], sizes = [8, 32], strides = [1, 1]} : vector<8x128xf32> to vector<8x32xf32>
    %158 = arith.mulf %155, %139 : vector<8x32xf32>
    %159 = arith.mulf %154, %156 : vector<8x32xf32>
    %160 = arith.addf %158, %159 : vector<8x32xf32>
    %161 = math.tanh %160 : vector<8x32xf32>
    %162 = arith.mulf %157, %161 : vector<8x32xf32>
    %163 = vector.extract_strided_slice %9 {offsets = [48, 0], sizes = [8, 128], strides = [1, 1]} : vector<56x128xf32> to vector<8x128xf32>
    %164 = arith.truncf %162 : vector<8x32xf32> to vector<8x32xbf16>
    %cst_26 = arith.constant dense<0.000000e+00> : vector<8x128xf32>
    %165 = tpu.matmul %164, %10, %cst_26 {dimension_numbers = #tpu.dot_dimension_numbers<[1], [0], [0], [1], [0, 0, 1, 1], [], []>} : vector<8x32xbf16>, vector<32x128xbf16>, vector<8x128xf32> -> vector<8x128xf32>
    %166 = arith.addf %163, %165 : vector<8x128xf32>
    %167 = arith.mulf %166, %19 : vector<8x128xf32>
    %168 = arith.negf %167 : vector<8x128xf32>
    %169 = math.exp %168 : vector<8x128xf32>
    %cst_27 = arith.constant 1.000000e+00 : f32
    %170 = vector.broadcast %cst_27 : f32 to vector<8x128xf32>
    %171 = arith.addf %170, %169 : vector<8x128xf32>
    %172 = arith.divf %170, %171 : vector<8x128xf32>
    %173 = arith.mulf %172, %19 : vector<8x128xf32>
    %174 = arith.addf %173, %22 : vector<8x128xf32>
    %175 = vector.extract_strided_slice %174 {offsets = [0, 0], sizes = [8, 32], strides = [1, 1]} : vector<8x128xf32> to vector<8x32xf32>
    %176 = vector.extract_strided_slice %174 {offsets = [0, 32], sizes = [8, 32], strides = [1, 1]} : vector<8x128xf32> to vector<8x32xf32>
    %177 = vector.extract_strided_slice %174 {offsets = [0, 64], sizes = [8, 32], strides = [1, 1]} : vector<8x128xf32> to vector<8x32xf32>
    %178 = vector.extract_strided_slice %174 {offsets = [0, 96], sizes = [8, 32], strides = [1, 1]} : vector<8x128xf32> to vector<8x32xf32>
    %179 = arith.mulf %176, %160 : vector<8x32xf32>
    %180 = arith.mulf %175, %177 : vector<8x32xf32>
    %181 = arith.addf %179, %180 : vector<8x32xf32>
    %182 = math.tanh %181 : vector<8x32xf32>
    %183 = arith.mulf %178, %182 : vector<8x32xf32>
    %c0_28 = arith.constant 0 : index
    %c0_29 = arith.constant 0 : index
    %184 = vector.load %arg4[%c0_28, %c0_29] : memref<32x8xf32, #tpu.memory_space<vmem>>, vector<32x8xf32>
    %cst_30 = arith.constant dense<0.000000e+00> : vector<8x8xf32>
    %185 = tpu.matmul %183, %184, %cst_30 {dimension_numbers = #tpu.dot_dimension_numbers<[1], [0], [0], [1], [0, 0, 1, 1], [], []>} : vector<8x32xf32>, vector<32x8xf32>, vector<8x8xf32> -> vector<8x8xf32>
    %c0_31 = arith.constant 0 : index
    %c0_32 = arith.constant 0 : index
    %186 = vector.load %arg5[%c0_31, %c0_32] : memref<1x8xf32, #tpu.memory_space<vmem>>, vector<1x8xf32>
    %187 = vector.broadcast %186 : vector<1x8xf32> to vector<8x8xf32>
    %188 = arith.addf %185, %187 : vector<8x8xf32>
    %cst_33 = arith.constant dense<0xFF800000> : vector<8xf32>
    %189 = vector.multi_reduction <maximumf>, %188, %cst_33 [1] : vector<8x8xf32> to vector<8xf32>
    %190 = vector.shape_cast %189 : vector<8xf32> to vector<8x1xf32>
    %191 = vector.broadcast %190 : vector<8x1xf32> to vector<8x8xf32>
    %192 = arith.subf %188, %191 : vector<8x8xf32>
    %193 = math.exp %192 : vector<8x8xf32>
    %cst_34 = arith.constant dense<0.000000e+00> : vector<8xf32>
    %194 = vector.multi_reduction <add>, %193, %cst_34 [1] : vector<8x8xf32> to vector<8xf32>
    %195 = vector.shape_cast %194 : vector<8xf32> to vector<8x1xf32>
    %196 = math.log %195 : vector<8x1xf32>
    %197 = vector.broadcast %196 : vector<8x1xf32> to vector<8x8xf32>
    %198 = arith.subf %192, %197 : vector<8x8xf32>
    %c0_35 = arith.constant 0 : index
    %c0_36 = arith.constant 0 : index
    %199 = vector.load %arg6[%c0_35, %c0_36] : memref<8x8xf32, #tpu.memory_space<vmem>>, vector<8x8xf32>
    tpu.vector_store %arg6[%c0_35, %c0_36], %198 {strides = array<i32>} : memref<8x8xf32, #tpu.memory_space<vmem>>, vector<8x8xf32>,
    return
  }
}

</mosaic_0001>

<llo_original>
// kernel: tpu_custom_call.1
$region0: #{tpu_custom_call.1}
  #allocation0 [shape = 'u32[]', space=smem, size = 0x4, offset = 0x4, fixed_abs, tag = 'smem constant byte address 0x4 - core index']
  #allocation1 [shape = 'u32[144,128]{1,0:T(1,128)}', space=vmem, size = 0x12000, scoped, tag = 'internal scratch']
  %s0 = inlined_call_operand.vmem [shape: bf16[64,16], index: 0, kind: input, shape index: {}]
  %s1 = inlined_call_operand.vmem [shape: bf16[16,128], index: 1, kind: input, shape index: {}]
  %s2 = inlined_call_operand.vmem [shape: bf16[32,128], index: 2, kind: input, shape index: {}]
  %s3 = inlined_call_operand.vmem [shape: f32[1,128], index: 3, kind: input, shape index: {}]
  %s4 = inlined_call_operand.vmem [shape: f32[32,8], index: 4, kind: input, shape index: {}]
  %s5 = inlined_call_operand.vmem [shape: f32[1,8], index: 5, kind: input, shape index: {}]
  %s6 = inlined_call_operand.hbm [shape: f32[8,8], index: 6, kind: output, shape index: {}]
  %s7 = sld [smem:[#allocation0]]
  $region34: #{tpu_custom_call.1} parent=0
    _
  %s9 = ssub.s32 1, %s7
  %s10 = scalar_select 0, %s9, %s7
  $region1: #{tpu_custom_call.1} parent=0
    #allocation2 [shape = 'u8[4096]{0}', space=vmem, size = 0x1000, scoped, tag = 'output window, operand 0, single buffered']
    #allocation3 [shape = 's32[1]{0}', space=sflag, size = 0x4, scoped, tag = 'scoped memory for tpu_custom_call.1']
    %11 = vsyncpa [#allocation3], 0
    // Predicated region
    $region2: #{tpu_custom_call.1} parent=1 // pred_check
      _
    $region3: #{tpu_custom_call.1} parent=1 // pred_check_branch
      %13 = sbr.rel (0) target = $region5
    $region4: #{tpu_custom_call.1} parent=1 // pred_region
      _
    $region5: #{tpu_custom_call.1} parent=1 // pred_fallthru
      _
    // Predicated region
    $region6: #{tpu_custom_call.1} parent=1 // pred_check
      _
    $region7: #{tpu_custom_call.1} parent=1 // pred_check_branch
      %15 = sbr.rel (0) target = $region9
    $region8: #{tpu_custom_call.1} parent=1 // pred_region
      _
    $region9: #{tpu_custom_call.1} parent=1 // pred_fallthru
      _
    // Predicated region
    $region10: #{tpu_custom_call.1} parent=1 // pred_check
      _
    $region11: #{tpu_custom_call.1} parent=1 // pred_check_branch
      %17 = sbr.rel (0) target = $region13
    $region12: #{tpu_custom_call.1} parent=1 // pred_region
      _
    $region13: #{tpu_custom_call.1} parent=1 // pred_fallthru
      _
    // Predicated region
    $region14: #{tpu_custom_call.1} parent=1 // pred_check
      _
    $region15: #{tpu_custom_call.1} parent=1 // pred_check_branch
      %19 = sbr.rel (0) target = $region17
    $region16: #{tpu_custom_call.1} parent=1 // pred_region
      _
    $region17: #{tpu_custom_call.1} parent=1 // pred_fallthru
      _
    // Predicated region
    $region18: #{tpu_custom_call.1} parent=1 // pred_check
      _
    $region19: #{tpu_custom_call.1} parent=1 // pred_check_branch
      %21 = sbr.rel (0) target = $region21
    $region20: #{tpu_custom_call.1} parent=1 // pred_region
      _
    $region21: #{tpu_custom_call.1} parent=1 // pred_fallthru
      _
    // Predicated region
    $region22: #{tpu_custom_call.1} parent=1 // pred_check
      _
    $region23: #{tpu_custom_call.1} parent=1 // pred_check_branch
      %23 = sbr.rel (0) target = $region25
    $region24: #{tpu_custom_call.1} parent=1 // pred_region
      _
    $region25: #{tpu_custom_call.1} parent=1 // pred_fallthru
      _
    %v25 = vld [vmem:[%s1] sm:$0xf]
    %v26 = vld [vmem:[%s1 + $0x4] sm:$0xf]
    %v27 = vld [vmem:[%s3] sm:$0x1]
    %v28 = vld [vmem:[%s0] sm:$0xf]
    %v30 = vlaneseq
    %v31 = vshrl.u32 %v30, 7
    %v32 = vsub.s32 0, %v31
    %v33 = vrot.slane %v27, %v32
    %v37 = vunpack.c.l.b16 %v25
    %v38 = vunpack.c.l.b16 %v26
    %v39 = vpack.c.b16 %v38, %v37
    %vm41 = vcmask 130048
    %v43 = vsel %vm41, %v28, 0
    %45 = vmatprep.subr.bf16.mxu0 0
    %46 = vmatpush1.bf16.msra.mxu0 %v39
    %47 = vmatprep.subr.bf16.mxu0 0
    %48 = vmatpush1.bf16.msra.mxu0 0
    %49 = vmatprep.subr.bf16.mxu0 0
    %50 = vmatpush1.bf16.msra.mxu0 0
    %51 = vmatprep.subr.bf16.mxu0 0
    %52 = vmatpush1.bf16.msra.mxu0 0
    %53 = vmatprep.subr.bf16.mxu0 0
    %54 = vmatpush1.bf16.msra.mxu0 0
    %55 = vmatprep.subr.bf16.mxu0 0
    %56 = vmatpush1.bf16.msra.mxu0 0
    %57 = vmatprep.subr.bf16.mxu0 0
    %58 = vmatpush1.bf16.msra.mxu0 0
    %59 = vmatprep.subr.bf16.mxu0 0
    %60 = vmatpush1.bf16.msra.mxu0 0
    %61 = vmatprep.subr.bf16.mxu0 0
    %62 = vmatpush1.bf16.msra.mxu0 0
    %63 = vmatprep.subr.bf16.mxu0 0
    %64 = vmatpush1.bf16.msra.mxu0 0
    %65 = vmatprep.subr.bf16.mxu0 0
    %66 = vmatpush1.bf16.msra.mxu0 0
    %67 = vmatprep.subr.bf16.mxu0 0
    %68 = vmatpush1.bf16.msra.mxu0 0
    %69 = vmatprep.subr.bf16.mxu0 0
    %70 = vmatpush1.bf16.msra.mxu0 0
    %71 = vmatprep.subr.bf16.mxu0 0
    %72 = vmatpush1.bf16.msra.mxu0 0
    %73 = vmatprep.subr.bf16.mxu0 0
    %74 = vmatpush1.bf16.msra.mxu0 0
    %75 = vmatprep.subr.bf16.mxu0 0
    %76 = vmatpush1.bf16.msra.mxu0 0
    %77 = vmatprep.mubr.bf16.mxu0 0
    %78 = vmatmul.mubr.bf16.gmra.mrb[0].mxu0 %v43
    %v79 = vpop.f32.mrb[0].mxu0
    %v80 = vadd.f32 %v33, %v79
    %v81 = vpop.f32.mrb[0].mxu0
    %v82 = vpop.f32.mrb[0].mxu0
    %v83 = vpop.f32.mrb[0].mxu0
    %84 = vdwg.mxu0
    %v85 = vld [vmem:[%s0 + $0x4] sm:$0xf]
    %v86 = vld [vmem:[%s0 + $0x8] sm:$0xf]
    %v87 = vld [vmem:[%s0 + $0xc] sm:$0xf]
    %v88 = vld [vmem:[%s0 + $0x10] sm:$0xf]
    %v89 = vld [vmem:[%s0 + $0x14] sm:$0xf]
    %v90 = vld [vmem:[%s0 + $0x18] sm:$0xf]
    %v91 = vld [vmem:[%s0 + $0x1c] sm:$0xf]
    %v99 = vunpack.c.l.b16 %v85
    %v100 = vunpack.c.l.b16 %v86
    %v101 = vunpack.c.l.b16 %v87
    %v102 = vunpack.c.l.b16 %v88
    %v103 = vunpack.c.l.b16 %v89
    %v104 = vunpack.c.l.b16 %v90
    %v105 = vunpack.c.l.b16 %v91
    %v106 = vpack.c.b16 %v100, %v99
    %v107 = vpack.c.b16 %v102, %v101
    %v108 = vpack.c.b16 %v104, %v103
    %v109 = vpack.c.b16 %v105, %v105
    %v111 = vsel %vm41, %v106, 0
    %v114 = vsel %vm41, %v107, 0
    %v117 = vsel %vm41, %v108, 0
    %v120 = vsel %vm41, %v109, 0
    %122 = vmatprep.subr.bf16.mxu0 0
    %123 = vmatpush1.bf16.msra.mxu0 %v39
    %124 = vmatprep.subr.bf16.mxu0 0
    %125 = vmatpush1.bf16.msra.mxu0 0
    %126 = vmatprep.subr.bf16.mxu0 0
    %127 = vmatpush1.bf16.msra.mxu0 0
    %128 = vmatprep.subr.bf16.mxu0 0
    %129 = vmatpush1.bf16.msra.mxu0 0
    %130 = vmatprep.subr.bf16.mxu0 0
    %131 = vmatpush1.bf16.msra.mxu0 0
    %132 = vmatprep.subr.bf16.mxu0 0
    %133 = vmatpush1.bf16.msra.mxu0 0
    %134 = vmatprep.subr.bf16.mxu0 0
    %135 = vmatpush1.bf16.msra.mxu0 0
    %136 = vmatprep.subr.bf16.mxu0 0
    %137 = vmatpush1.bf16.msra.mxu0 0
    %138 = vmatprep.subr.bf16.mxu0 0
    %139 = vmatpush1.bf16.msra.mxu0 0
    %140 = vmatprep.subr.bf16.mxu0 0
    %141 = vmatpush1.bf16.msra.mxu0 0
    %142 = vmatprep.subr.bf16.mxu0 0
    %143 = vmatpush1.bf16.msra.mxu0 0
    %144 = vmatprep.subr.bf16.mxu0 0
    %145 = vmatpush1.bf16.msra.mxu0 0
    %146 = vmatprep.subr.bf16.mxu0 0
    %147 = vmatpush1.bf16.msra.mxu0 0
    %148 = vmatprep.subr.bf16.mxu0 0
    %149 = vmatpush1.bf16.msra.mxu0 0
    %150 = vmatprep.subr.bf16.mxu0 0
    %151 = vmatpush1.bf16.msra.mxu0 0
    %152 = vmatprep.subr.bf16.mxu0 0
    %153 = vmatpush1.bf16.msra.mxu0 0
    %154 = vmatprep.mubr.bf16.mxu0 0
    %155 = vmatmul.mubr.bf16.gmra.mrb[0].mxu0 %v111
    %v156 = vpop.f32.mrb[0].mxu0
    %v157 = vadd.f32 %v33, %v156
    %v158 = vpop.f32.mrb[0].mxu0
    %v159 = vpop.f32.mrb[0].mxu0
    %v160 = vadd.f32 %v33, %v159
    %v161 = vpop.f32.mrb[0].mxu0
    %162 = vmatprep.mubr.bf16.mxu0 0
    %163 = vmatmul.mubr.bf16.gmra.mrb[0].mxu0 %v114
    %v164 = vpop.f32.mrb[0].mxu0
    %v165 = vadd.f32 %v33, %v164
    %v166 = vpop.f32.mrb[0].mxu0
    %v167 = vpop.f32.mrb[0].mxu0
    %v168 = vadd.f32 %v33, %v167
    %v169 = vpop.f32.mrb[0].mxu0
    %170 = vmatprep.mubr.bf16.mxu0 0
    %171 = vmatmul.mubr.bf16.gmra.mrb[0].mxu0 %v117
    %v172 = vpop.f32.mrb[0].mxu0
    %v173 = vadd.f32 %v33, %v172
    %v174 = vpop.f32.mrb[0].mxu0
    %v175 = vpop.f32.mrb[0].mxu0
    %v176 = vadd.f32 %v33, %v175
    %v177 = vpop.f32.mrb[0].mxu0
    %178 = vmatprep.mubr.bf16.mxu0 0
    %179 = vmatmul.mubr.bf16.gmra.mrb[0].mxu0 %v120
    %v180 = vpop.f32.mrb[0].mxu0
    %v181 = vadd.f32 %v33, %v180
    %v182 = vpop.f32.mrb[0].mxu0
    %v183 = vpop.f32.mrb[0].mxu0
    %v184 = vpop.f32.mrb[0].mxu0
    %185 = vdwg.mxu0
    %v186 = vld [vmem:[%s2] sm:$0xf]
    %v187 = vld [vmem:[%s2 + $0x4] sm:$0xf]
    %v188 = vld [vmem:[%s2 + $0x8] sm:$0xf]
    %v189 = vld [vmem:[%s2 + $0xc] sm:$0xf]
    %v190 = vlaneseq
    %v191 = vand.u32 %v190, 127
    %vm192 = vcmp.ge.s32.totalorder %v191, 64
    %vm193 = vcmp.lt.s32.totalorder %v191, 96
    %vm194 = vmand %vm192, %vm193
    %v195 = vsel %vm194, 2.0, 1.0
    %v196 = vsel %vm194, -1.0, 0.0
    %v197 = vmul.f32 %v80, %v195
    %v198 = vxor.u32 %v197, 2147483648
    %v199 = vmul.f32 %v198, 1.442695
    %v200 = vpow.pop %v199
    %v201 = vadd.f32 %v200, 1.0
    %v202 = vrcp.pop %v201
    %v203 = vmul.f32 1.0, %v202
    %v204 = vmul.f32 %v203, %v195
    %v205 = vadd.f32 %v204, %v196
    %207 = vrot.lane.b32.xlu0 %v205, 64
    %v208 = vpop.permute.xlu0 %207
    %v210 = vmul.f32 %v205, %v208
    %v211 = vtanh.pop %v210
    %213 = vrot.lane.b32.xlu0 %v211, 96
    %v214 = vpop.permute.xlu0 %213
    %v216 = vmul.f32 %v205, %v214
    %v217 = vpack.c.bf16 %v216, %v216
    %219 = vrot.lane.b32.xlu0 %v217, 32
    %v220 = vpop.permute.xlu0 %219
    %v225 = vunpack.c.l.b16 %v186
    %v226 = vunpack.c.l.b16 %v187
    %v227 = vunpack.c.l.b16 %v188
    %v228 = vunpack.c.l.b16 %v189
    %v229 = vpack.c.b16 %v226, %v225
    %v230 = vpack.c.b16 %v228, %v227
    %vm233 = vcmask 261120
    %v235 = vsel %vm233, %v220, 0
    %237 = vmatprep.subr.bf16.mxu0 0
    %238 = vmatpush1.bf16.msra.mxu0 %v229
    %239 = vmatprep.subr.bf16.mxu0 0
    %240 = vmatpush1.bf16.msra.mxu0 %v230
    %241 = vmatprep.subr.bf16.mxu0 0
    %242 = vmatpush1.bf16.msra.mxu0 0
    %243 = vmatprep.subr.bf16.mxu0 0
    %244 = vmatpush1.bf16.msra.mxu0 0
    %245 = vmatprep.subr.bf16.mxu0 0
    %246 = vmatpush1.bf16.msra.mxu0 0
    %247 = vmatprep.subr.bf16.mxu0 0
    %248 = vmatpush1.bf16.msra.mxu0 0
    %249 = vmatprep.subr.bf16.mxu0 0
    %250 = vmatpush1.bf16.msra.mxu0 0
    %251 = vmatprep.subr.bf16.mxu0 0
    %252 = vmatpush1.bf16.msra.mxu0 0
    %253 = vmatprep.subr.bf16.mxu0 0
    %254 = vmatpush1.bf16.msra.mxu0 0
    %255 = vmatprep.subr.bf16.mxu0 0
    %256 = vmatpush1.bf16.msra.mxu0 0
    %257 = vmatprep.subr.bf16.mxu0 0
    %258 = vmatpush1.bf16.msra.mxu0 0
    %259 = vmatprep.subr.bf16.mxu0 0
    %260 = vmatpush1.bf16.msra.mxu0 0
    %261 = vmatprep.subr.bf16.mxu0 0
    %262 = vmatpush1.bf16.msra.mxu0 0
    %263 = vmatprep.subr.bf16.mxu0 0
    %264 = vmatpush1.bf16.msra.mxu0 0
    %265 = vmatprep.subr.bf16.mxu0 0
    %266 = vmatpush1.bf16.msra.mxu0 0
    %267 = vmatprep.subr.bf16.mxu0 0
    %268 = vmatpush1.bf16.msra.mxu0 0
    %269 = vmatprep.mubr.bf16.mxu0 0
    %270 = vmatmul.mubr.bf16.gmra.mrb[0].mxu0 %v235
    %v271 = vpop.f32.mrb[0].mxu0
    %v272 = vadd.f32 0.0, %v271
    %v273 = vpop.f32.mrb[0].mxu0
    %v274 = vpop.f32.mrb[0].mxu0
    %v275 = vpop.f32.mrb[0].mxu0
    %276 = vdwg.mxu0
    %v277 = vadd.f32 %v157, %v272
    %v278 = vmul.f32 %v277, %v195
    %v279 = vxor.u32 %v278, 2147483648
    %v280 = vmul.f32 %v279, 1.442695
    %v281 = vpow.pop %v280
    %v282 = vadd.f32 %v281, 1.0
    %v283 = vrcp.pop %v282
    %v284 = vmul.f32 1.0, %v283
    %v285 = vmul.f32 %v284, %v195
    %v286 = vadd.f32 %v285, %v196
    %288 = vrot.lane.b32.xlu0 %v210, 32
    %v289 = vpop.permute.xlu0 %288
    %v291 = vmul.f32 %v286, %v289
    %293 = vrot.lane.b32.xlu0 %v286, 64
    %v294 = vpop.permute.xlu0 %293
    %v296 = vmul.f32 %v286, %v294
    %298 = vrot.lane.b32.xlu0 %v296, 32
    %v299 = vpop.permute.xlu0 %298
    %v301 = vadd.f32 %v291, %v299
    %v302 = vtanh.pop %v301
    %304 = vrot.lane.b32.xlu0 %v302, 64
    %v305 = vpop.permute.xlu0 %304
    %v307 = vmul.f32 %v286, %v305
    %v308 = vpack.c.bf16 %v307, %v307
    %310 = vrot.lane.b32.xlu0 %v308, 32
    %v311 = vpop.permute.xlu0 %310
    %v313 = vsel %vm233, %v311, 0
    %315 = vmatprep.subr.bf16.mxu0 0
    %316 = vmatpush1.bf16.msra.mxu0 %v229
    %317 = vmatprep.subr.bf16.mxu0 0
    %318 = vmatpush1.bf16.msra.mxu0 %v230
    %319 = vmatprep.subr.bf16.mxu0 0
    %320 = vmatpush1.bf16.msra.mxu0 0
    %321 = vmatprep.subr.bf16.mxu0 0
    %322 = vmatpush1.bf16.msra.mxu0 0
    %323 = vmatprep.subr.bf16.mxu0 0
    %324 = vmatpush1.bf16.msra.mxu0 0
    %325 = vmatprep.subr.bf16.mxu0 0
    %326 = vmatpush1.bf16.msra.mxu0 0
    %327 = vmatprep.subr.bf16.mxu0 0
    %328 = vmatpush1.bf16.msra.mxu0 0
    %329 = vmatprep.subr.bf16.mxu0 0
    %330 = vmatpush1.bf16.msra.mxu0 0
    %331 = vmatprep.subr.bf16.mxu0 0
    %332 = vmatpush1.bf16.msra.mxu0 0
    %333 = vmatprep.subr.bf16.mxu0 0
    %334 = vmatpush1.bf16.msra.mxu0 0
    %335 = vmatprep.subr.bf16.mxu0 0
    %336 = vmatpush1.bf16.msra.mxu0 0
    %337 = vmatprep.subr.bf16.mxu0 0
    %338 = vmatpush1.bf16.msra.mxu0 0
    %339 = vmatprep.subr.bf16.mxu0 0
    %340 = vmatpush1.bf16.msra.mxu0 0
    %341 = vmatprep.subr.bf16.mxu0 0
    %342 = vmatpush1.bf16.msra.mxu0 0
    %343 = vmatprep.subr.bf16.mxu0 0
    %344 = vmatpush1.bf16.msra.mxu0 0
    %345 = vmatprep.subr.bf16.mxu0 0
    %346 = vmatpush1.bf16.msra.mxu0 0
    %347 = vmatprep.mubr.bf16.mxu0 0
    %348 = vmatmul.mubr.bf16.gmra.mrb[0].mxu0 %v313
    %v349 = vpop.f32.mrb[0].mxu0
    %v350 = vadd.f32 0.0, %v349
    %v351 = vpop.f32.mrb[0].mxu0
    %v352 = vpop.f32.mrb[0].mxu0
    %v353 = vpop.f32.mrb[0].mxu0
    %354 = vdwg.mxu0
    %v355 = vadd.f32 %v160, %v350
    %v356 = vmul.f32 %v355, %v195
    %v357 = vxor.u32 %v356, 2147483648
    %v358 = vmul.f32 %v357, 1.442695
    %v359 = vpow.pop %v358
    %v360 = vadd.f32 %v359, 1.0
    %v361 = vrcp.pop %v360
    %v362 = vmul.f32 1.0, %v361
    %v363 = vmul.f32 %v362, %v195
    %v364 = vadd.f32 %v363, %v196
    %v365 = vmul.f32 %v364, %v301
    %367 = vrot.lane.b32.xlu0 %v364, 64
    %v368 = vpop.permute.xlu0 %367
    %v370 = vmul.f32 %v364, %v368
    %372 = vrot.lane.b32.xlu0 %v370, 32
    %v373 = vpop.permute.xlu0 %372
    %v375 = vadd.f32 %v365, %v373
    %v376 = vtanh.pop %v375
    %378 = vrot.lane.b32.xlu0 %v376, 64
    %v379 = vpop.permute.xlu0 %378
    %v381 = vmul.f32 %v364, %v379
    %v382 = vpack.c.bf16 %v381, %v381
    %384 = vrot.lane.b32.xlu0 %v382, 32
    %v385 = vpop.permute.xlu0 %384
    %v387 = vsel %vm233, %v385, 0
    %389 = vmatprep.subr.bf16.mxu0 0
    %390 = vmatpush1.bf16.msra.mxu0 %v229
    %391 = vmatprep.subr.bf16.mxu0 0
    %392 = vmatpush1.bf16.msra.mxu0 %v230
    %393 = vmatprep.subr.bf16.mxu0 0
    %394 = vmatpush1.bf16.msra.mxu0 0
    %395 = vmatprep.subr.bf16.mxu0 0
    %396 = vmatpush1.bf16.msra.mxu0 0
    %397 = vmatprep.subr.bf16.mxu0 0
    %398 = vmatpush1.bf16.msra.mxu0 0
    %399 = vmatprep.subr.bf16.mxu0 0
    %400 = vmatpush1.bf16.msra.mxu0 0
    %401 = vmatprep.subr.bf16.mxu0 0
    %402 = vmatpush1.bf16.msra.mxu0 0
    %403 = vmatprep.subr.bf16.mxu0 0
    %404 = vmatpush1.bf16.msra.mxu0 0
    %405 = vmatprep.subr.bf16.mxu0 0
    %406 = vmatpush1.bf16.msra.mxu0 0
    %407 = vmatprep.subr.bf16.mxu0 0
    %408 = vmatpush1.bf16.msra.mxu0 0
    %409 = vmatprep.subr.bf16.mxu0 0
    %410 = vmatpush1.bf16.msra.mxu0 0
    %411 = vmatprep.subr.bf16.mxu0 0
    %412 = vmatpush1.bf16.msra.mxu0 0
    %413 = vmatprep.subr.bf16.mxu0 0
    %414 = vmatpush1.bf16.msra.mxu0 0
    %415 = vmatprep.subr.bf16.mxu0 0
    %416 = vmatpush1.bf16.msra.mxu0 0
    %417 = vmatprep.subr.bf16.mxu0 0
    %418 = vmatpush1.bf16.msra.mxu0 0
    %419 = vmatprep.subr.bf16.mxu0 0
    %420 = vmatpush1.bf16.msra.mxu0 0
    %421 = vmatprep.mubr.bf16.mxu0 0
    %422 = vmatmul.mubr.bf16.gmra.mrb[0].mxu0 %v387
    %v423 = vpop.f32.mrb[0].mxu0
    %v424 = vadd.f32 0.0, %v423
    %v425 = vpop.f32.mrb[0].mxu0
    %v426 = vpop.f32.mrb[0].mxu0
    %v427 = vpop.f32.mrb[0].mxu0
    %428 = vdwg.mxu0
    %v429 = vadd.f32 %v165, %v424
    %v430 = vmul.f32 %v429, %v195
    %v431 = vxor.u32 %v430, 2147483648
    %v432 = vmul.f32 %v431, 1.442695
    %v433 = vpow.pop %v432
    %v434 = vadd.f32 %v433, 1.0
    %v435 = vrcp.pop %v434
    %v436 = vmul.f32 1.0, %v435
    %v437 = vmul.f32 %v436, %v195
    %v438 = vadd.f32 %v437, %v196
    %v439 = vmul.f32 %v438, %v375
    %441 = vrot.lane.b32.xlu0 %v438, 64
    %v442 = vpop.permute.xlu0 %441
    %v444 = vmul.f32 %v438, %v442
    %446 = vrot.lane.b32.xlu0 %v444, 32
    %v447 = vpop.permute.xlu0 %446
    %v449 = vadd.f32 %v439, %v447
    %v450 = vtanh.pop %v449
    %452 = vrot.lane.b32.xlu0 %v450, 64
    %v453 = vpop.permute.xlu0 %452
    %v455 = vmul.f32 %v438, %v453
    %v456 = vpack.c.bf16 %v455, %v455
    %458 = vrot.lane.b32.xlu0 %v456, 32
    %v459 = vpop.permute.xlu0 %458
    %v461 = vsel %vm233, %v459, 0
    %463 = vmatprep.subr.bf16.mxu0 0
    %464 = vmatpush1.bf16.msra.mxu0 %v229
    %465 = vmatprep.subr.bf16.mxu0 0
    %466 = vmatpush1.bf16.msra.mxu0 %v230
    %467 = vmatprep.subr.bf16.mxu0 0
    %468 = vmatpush1.bf16.msra.mxu0 0
    %469 = vmatprep.subr.bf16.mxu0 0
    %470 = vmatpush1.bf16.msra.mxu0 0
    %471 = vmatprep.subr.bf16.mxu0 0
    %472 = vmatpush1.bf16.msra.mxu0 0
    %473 = vmatprep.subr.bf16.mxu0 0
    %474 = vmatpush1.bf16.msra.mxu0 0
    %475 = vmatprep.subr.bf16.mxu0 0
    %476 = vmatpush1.bf16.msra.mxu0 0
    %477 = vmatprep.subr.bf16.mxu0 0
    %478 = vmatpush1.bf16.msra.mxu0 0
    %479 = vmatprep.subr.bf16.mxu0 0
    %480 = vmatpush1.bf16.msra.mxu0 0
    %481 = vmatprep.subr.bf16.mxu0 0
    %482 = vmatpush1.bf16.msra.mxu0 0
    %483 = vmatprep.subr.bf16.mxu0 0
    %484 = vmatpush1.bf16.msra.mxu0 0
    %485 = vmatprep.subr.bf16.mxu0 0
    %486 = vmatpush1.bf16.msra.mxu0 0
    %487 = vmatprep.subr.bf16.mxu0 0
    %488 = vmatpush1.bf16.msra.mxu0 0
    %489 = vmatprep.subr.bf16.mxu0 0
    %490 = vmatpush1.bf16.msra.mxu0 0
    %491 = vmatprep.subr.bf16.mxu0 0
    %492 = vmatpush1.bf16.msra.mxu0 0
    %493 = vmatprep.subr.bf16.mxu0 0
    %494 = vmatpush1.bf16.msra.mxu0 0
    %495 = vmatprep.mubr.bf16.mxu0 0
    %496 = vmatmul.mubr.bf16.gmra.mrb[0].mxu0 %v461
    %v497 = vpop.f32.mrb[0].mxu0
    %v498 = vadd.f32 0.0, %v497
    %v499 = vpop.f32.mrb[0].mxu0
    %v500 = vpop.f32.mrb[0].mxu0
    %v501 = vpop.f32.mrb[0].mxu0
    %502 = vdwg.mxu0
    %v503 = vadd.f32 %v168, %v498
    %v504 = vmul.f32 %v503, %v195
    %v505 = vxor.u32 %v504, 2147483648
    %v506 = vmul.f32 %v505, 1.442695
    %v507 = vpow.pop %v506
    %v508 = vadd.f32 %v507, 1.0
    %v509 = vrcp.pop %v508
    %v510 = vmul.f32 1.0, %v509
    %v511 = vmul.f32 %v510, %v195
    %v512 = vadd.f32 %v511, %v196
    %v513 = vmul.f32 %v512, %v449
    %515 = vrot.lane.b32.xlu0 %v512, 64
    %v516 = vpop.permute.xlu0 %515
    %v518 = vmul.f32 %v512, %v516
    %520 = vrot.lane.b32.xlu0 %v518, 32
    %v521 = vpop.permute.xlu0 %520
    %v523 = vadd.f32 %v513, %v521
    %v524 = vtanh.pop %v523
    %526 = vrot.lane.b32.xlu0 %v524, 64
    %v527 = vpop.permute.xlu0 %526
    %v529 = vmul.f32 %v512, %v527
    %v530 = vpack.c.bf16 %v529, %v529
    %532 = vrot.lane.b32.xlu0 %v530, 32
    %v533 = vpop.permute.xlu0 %532
    %v535 = vsel %vm233, %v533, 0
    %537 = vmatprep.subr.bf16.mxu0 0
    %538 = vmatpush1.bf16.msra.mxu0 %v229
    %539 = vmatprep.subr.bf16.mxu0 0
    %540 = vmatpush1.bf16.msra.mxu0 %v230
    %541 = vmatprep.subr.bf16.mxu0 0
    %542 = vmatpush1.bf16.msra.mxu0 0
    %543 = vmatprep.subr.bf16.mxu0 0
    %544 = vmatpush1.bf16.msra.mxu0 0
    %545 = vmatprep.subr.bf16.mxu0 0
    %546 = vmatpush1.bf16.msra.mxu0 0
    %547 = vmatprep.subr.bf16.mxu0 0
    %548 = vmatpush1.bf16.msra.mxu0 0
    %549 = vmatprep.subr.bf16.mxu0 0
    %550 = vmatpush1.bf16.msra.mxu0 0
    %551 = vmatprep.subr.bf16.mxu0 0
    %552 = vmatpush1.bf16.msra.mxu0 0
    %553 = vmatprep.subr.bf16.mxu0 0
    %554 = vmatpush1.bf16.msra.mxu0 0
    %555 = vmatprep.subr.bf16.mxu0 0
    %556 = vmatpush1.bf16.msra.mxu0 0
    %557 = vmatprep.subr.bf16.mxu0 0
    %558 = vmatpush1.bf16.msra.mxu0 0
    %559 = vmatprep.subr.bf16.mxu0 0
    %560 = vmatpush1.bf16.msra.mxu0 0
    %561 = vmatprep.subr.bf16.mxu0 0
    %562 = vmatpush1.bf16.msra.mxu0 0
    %563 = vmatprep.subr.bf16.mxu0 0
    %564 = vmatpush1.bf16.msra.mxu0 0
    %565 = vmatprep.subr.bf16.mxu0 0
    %566 = vmatpush1.bf16.msra.mxu0 0
    %567 = vmatprep.subr.bf16.mxu0 0
    %568 = vmatpush1.bf16.msra.mxu0 0
    %569 = vmatprep.mubr.bf16.mxu0 0
    %570 = vmatmul.mubr.bf16.gmra.mrb[0].mxu0 %v535
    %v571 = vpop.f32.mrb[0].mxu0
    %v572 = vadd.f32 0.0, %v571
    %v573 = vpop.f32.mrb[0].mxu0
    %v574 = vpop.f32.mrb[0].mxu0
    %v575 = vpop.f32.mrb[0].mxu0
    %576 = vdwg.mxu0
    %v577 = vadd.f32 %v173, %v572
    %v578 = vmul.f32 %v577, %v195
    %v579 = vxor.u32 %v578, 2147483648
    %v580 = vmul.f32 %v579, 1.442695
    %v581 = vpow.pop %v580
    %v582 = vadd.f32 %v581, 1.0
    %v583 = vrcp.pop %v582
    %v584 = vmul.f32 1.0, %v583
    %v585 = vmul.f32 %v584, %v195
    %v586 = vadd.f32 %v585, %v196
    %v587 = vmul.f32 %v586, %v523
    %589 = vrot.lane.b32.xlu0 %v586, 64
    %v590 = vpop.permute.xlu0 %589
    %v592 = vmul.f32 %v586, %v590
    %594 = vrot.lane.b32.xlu0 %v592, 32
    %v595 = vpop.permute.xlu0 %594
    %v597 = vadd.f32 %v587, %v595
    %v598 = vtanh.pop %v597
    %600 = vrot.lane.b32.xlu0 %v598, 64
    %v601 = vpop.permute.xlu0 %600
    %v603 = vmul.f32 %v586, %v601
    %v604 = vpack.c.bf16 %v603, %v603
    %606 = vrot.lane.b32.xlu0 %v604, 32
    %v607 = vpop.permute.xlu0 %606
    %v609 = vsel %vm233, %v607, 0
    %611 = vmatprep.subr.bf16.mxu0 0
    %612 = vmatpush1.bf16.msra.mxu0 %v229
    %613 = vmatprep.subr.bf16.mxu0 0
    %614 = vmatpush1.bf16.msra.mxu0 %v230
    %615 = vmatprep.subr.bf16.mxu0 0
    %616 = vmatpush1.bf16.msra.mxu0 0
    %617 = vmatprep.subr.bf16.mxu0 0
    %618 = vmatpush1.bf16.msra.mxu0 0
    %619 = vmatprep.subr.bf16.mxu0 0
    %620 = vmatpush1.bf16.msra.mxu0 0
    %621 = vmatprep.subr.bf16.mxu0 0
    %622 = vmatpush1.bf16.msra.mxu0 0
    %623 = vmatprep.subr.bf16.mxu0 0
    %624 = vmatpush1.bf16.msra.mxu0 0
    %625 = vmatprep.subr.bf16.mxu0 0
    %626 = vmatpush1.bf16.msra.mxu0 0
    %627 = vmatprep.subr.bf16.mxu0 0
    %628 = vmatpush1.bf16.msra.mxu0 0
    %629 = vmatprep.subr.bf16.mxu0 0
    %630 = vmatpush1.bf16.msra.mxu0 0
    %631 = vmatprep.subr.bf16.mxu0 0
    %632 = vmatpush1.bf16.msra.mxu0 0
    %633 = vmatprep.subr.bf16.mxu0 0
    %634 = vmatpush1.bf16.msra.mxu0 0
    %635 = vmatprep.subr.bf16.mxu0 0
    %636 = vmatpush1.bf16.msra.mxu0 0
    %637 = vmatprep.subr.bf16.mxu0 0
    %638 = vmatpush1.bf16.msra.mxu0 0
    %639 = vmatprep.subr.bf16.mxu0 0
    %640 = vmatpush1.bf16.msra.mxu0 0
    %641 = vmatprep.subr.bf16.mxu0 0
    %642 = vmatpush1.bf16.msra.mxu0 0
    %643 = vmatprep.mubr.bf16.mxu0 0
    %644 = vmatmul.mubr.bf16.gmra.mrb[0].mxu0 %v609
    %v645 = vpop.f32.mrb[0].mxu0
    %v646 = vadd.f32 0.0, %v645
    %v647 = vpop.f32.mrb[0].mxu0
    %v648 = vpop.f32.mrb[0].mxu0
    %v649 = vpop.f32.mrb[0].mxu0
    %650 = vdwg.mxu0
    %v651 = vadd.f32 %v176, %v646
    %v652 = vmul.f32 %v651, %v195
    %v653 = vxor.u32 %v652, 2147483648
    %v654 = vmul.f32 %v653, 1.442695
    %v655 = vpow.pop %v654
    %v656 = vadd.f32 %v655, 1.0
    %v657 = vrcp.pop %v656
    %v658 = vmul.f32 1.0, %v657
    %v659 = vmul.f32 %v658, %v195
    %v660 = vadd.f32 %v659, %v196
    %v661 = vmul.f32 %v660, %v597
    %663 = vrot.lane.b32.xlu0 %v660, 64
    %v664 = vpop.permute.xlu0 %663
    %v666 = vmul.f32 %v660, %v664
    %668 = vrot.lane.b32.xlu0 %v666, 32
    %v669 = vpop.permute.xlu0 %668
    %v671 = vadd.f32 %v661, %v669
    %v672 = vtanh.pop %v671
    %674 = vrot.lane.b32.xlu0 %v672, 64
    %v675 = vpop.permute.xlu0 %674
    %v677 = vmul.f32 %v660, %v675
    %v678 = vpack.c.bf16 %v677, %v677
    %680 = vrot.lane.b32.xlu0 %v678, 32
    %v681 = vpop.permute.xlu0 %680
    %v683 = vsel %vm233, %v681, 0
    %685 = vmatprep.subr.bf16.mxu0 0
    %686 = vmatpush1.bf16.msra.mxu0 %v229
    %687 = vmatprep.subr.bf16.mxu0 0
    %688 = vmatpush1.bf16.msra.mxu0 %v230
    %689 = vmatprep.subr.bf16.mxu0 0
    %690 = vmatpush1.bf16.msra.mxu0 0
    %691 = vmatprep.subr.bf16.mxu0 0
    %692 = vmatpush1.bf16.msra.mxu0 0
    %693 = vmatprep.subr.bf16.mxu0 0
    %694 = vmatpush1.bf16.msra.mxu0 0
    %695 = vmatprep.subr.bf16.mxu0 0
    %696 = vmatpush1.bf16.msra.mxu0 0
    %697 = vmatprep.subr.bf16.mxu0 0
    %698 = vmatpush1.bf16.msra.mxu0 0
    %699 = vmatprep.subr.bf16.mxu0 0
    %700 = vmatpush1.bf16.msra.mxu0 0
    %701 = vmatprep.subr.bf16.mxu0 0
    %702 = vmatpush1.bf16.msra.mxu0 0
    %703 = vmatprep.subr.bf16.mxu0 0
    %704 = vmatpush1.bf16.msra.mxu0 0
    %705 = vmatprep.subr.bf16.mxu0 0
    %706 = vmatpush1.bf16.msra.mxu0 0
    %707 = vmatprep.subr.bf16.mxu0 0
    %708 = vmatpush1.bf16.msra.mxu0 0
    %709 = vmatprep.subr.bf16.mxu0 0
    %710 = vmatpush1.bf16.msra.mxu0 0
    %711 = vmatprep.subr.bf16.mxu0 0
    %712 = vmatpush1.bf16.msra.mxu0 0
    %713 = vmatprep.subr.bf16.mxu0 0
    %714 = vmatpush1.bf16.msra.mxu0 0
    %715 = vmatprep.subr.bf16.mxu0 0
    %716 = vmatpush1.bf16.msra.mxu0 0
    %717 = vmatprep.mubr.bf16.mxu0 0
    %718 = vmatmul.mubr.bf16.gmra.mrb[0].mxu0 %v683
    %v719 = vpop.f32.mrb[0].mxu0
    %v720 = vadd.f32 0.0, %v719
    %v721 = vpop.f32.mrb[0].mxu0
    %v722 = vpop.f32.mrb[0].mxu0
    %v723 = vpop.f32.mrb[0].mxu0
    %724 = vdwg.mxu0
    %v725 = vadd.f32 %v181, %v720
    %v726 = vmul.f32 %v725, %v195
    %v727 = vxor.u32 %v726, 2147483648
    %v728 = vmul.f32 %v727, 1.442695
    %v729 = vpow.pop %v728
    %v730 = vadd.f32 %v729, 1.0
    %v731 = vrcp.pop %v730
    %v732 = vmul.f32 1.0, %v731
    %v733 = vmul.f32 %v732, %v195
    %v734 = vadd.f32 %v733, %v196
    %v735 = vmul.f32 %v734, %v671
    %737 = vrot.lane.b32.xlu0 %v734, 64
    %v738 = vpop.permute.xlu0 %737
    %v740 = vmul.f32 %v734, %v738
    %742 = vrot.lane.b32.xlu0 %v740, 32
    %v743 = vpop.permute.xlu0 %742
    %v745 = vadd.f32 %v735, %v743
    %v746 = vtanh.pop %v745
    %748 = vrot.lane.b32.xlu0 %v746, 64
    %v749 = vpop.permute.xlu0 %748
    %v751 = vmul.f32 %v734, %v749
    %v752 = vld [vmem:[%s4] sm:$0xff]
    %v753 = vld [vmem:[%s4 + $0x8] sm:$0xff]
    %v754 = vld [vmem:[%s4 + $0x10] sm:$0xff]
    %v755 = vld [vmem:[%s4 + $0x18] sm:$0xff]
    %v756 = vld [vmem:[%s5] sm:$0x1]
    %v758 = vlaneseq
    %v759 = vshrl.u32 %v758, 7
    %v760 = vsub.s32 0, %v759
    %v761 = vrot.slane %v756, %v760
    %764 = vrot.lane.b32.xlu0 %v751, 32
    %v765 = vpop.permute.xlu0 %764
    %v766 = vsel %vm233, %v765, 0
    %768 = vmatprep.subr.mxu0 0.0
    %769 = vmatpush1.msra.mxu0 %v752
    %770 = vmatprep.subr.mxu0 0.0
    %771 = vmatpush1.msra.mxu0 %v753
    %772 = vmatprep.subr.mxu0 0.0
    %773 = vmatpush1.msra.mxu0 %v754
    %774 = vmatprep.subr.mxu0 0.0
    %775 = vmatpush1.msra.mxu0 %v755
    %776 = vmatprep.subr.mxu0 0.0
    %777 = vmatpush1.msra.mxu0 0.0
    %778 = vmatprep.subr.mxu0 0.0
    %779 = vmatpush1.msra.mxu0 0.0
    %780 = vmatprep.subr.mxu0 0.0
    %781 = vmatpush1.msra.mxu0 0.0
    %782 = vmatprep.subr.mxu0 0.0
    %783 = vmatpush1.msra.mxu0 0.0
    %784 = vmatprep.subr.mxu0 0.0
    %785 = vmatpush1.msra.mxu0 0.0
    %786 = vmatprep.subr.mxu0 0.0
    %787 = vmatpush1.msra.mxu0 0.0
    %788 = vmatprep.subr.mxu0 0.0
    %789 = vmatpush1.msra.mxu0 0.0
    %790 = vmatprep.subr.mxu0 0.0
    %791 = vmatpush1.msra.mxu0 0.0
    %792 = vmatprep.subr.mxu0 0.0
    %793 = vmatpush1.msra.mxu0 0.0
    %794 = vmatprep.subr.mxu0 0.0
    %795 = vmatpush1.msra.mxu0 0.0
    %796 = vmatprep.subr.mxu0 0.0
    %797 = vmatpush1.msra.mxu0 0.0
    %798 = vmatprep.subr.mxu0 0.0
    %799 = vmatpush1.msra.mxu0 0.0
    %800 = vmatprep.subr.mxu0 0.0
    %801 = vmatpush1.msra.mxu0 0.0
    %802 = vmatprep.subr.mxu0 0.0
    %803 = vmatpush1.msra.mxu0 0.0
    %804 = vmatprep.subr.mxu0 0.0
    %805 = vmatpush1.msra.mxu0 0.0
    %806 = vmatprep.subr.mxu0 0.0
    %807 = vmatpush1.msra.mxu0 0.0
    %808 = vmatprep.subr.mxu0 0.0
    %809 = vmatpush1.msra.mxu0 0.0
    %810 = vmatprep.subr.mxu0 0.0
    %811 = vmatpush1.msra.mxu0 0.0
    %812 = vmatprep.subr.mxu0 0.0
    %813 = vmatpush1.msra.mxu0 0.0
    %814 = vmatprep.subr.mxu0 0.0
    %815 = vmatpush1.msra.mxu0 0.0
    %816 = vmatprep.subr.mxu0 0.0
    %817 = vmatpush1.msra.mxu0 0.0
    %818 = vmatprep.subr.mxu0 0.0
    %819 = vmatpush1.msra.mxu0 0.0
    %820 = vmatprep.subr.mxu0 0.0
    %821 = vmatpush1.msra.mxu0 0.0
    %822 = vmatprep.subr.mxu0 0.0
    %823 = vmatpush1.msra.mxu0 0.0
    %824 = vmatprep.subr.mxu0 0.0
    %825 = vmatpush1.msra.mxu0 0.0
    %826 = vmatprep.subr.mxu0 0.0
    %827 = vmatpush1.msra.mxu0 0.0
    %828 = vmatprep.subr.mxu0 0.0
    %829 = vmatpush1.msra.mxu0 0.0
    %830 = vmatprep.subr.mxu0 0.0
    %831 = vmatpush1.msra.mxu0 0.0
    %832 = vmatprep.mubr.f32.mxu0 0.0
    %833 = vmatmul.mubr.f32.gmra.mrb[0].mxu0 %v766
    %v834 = vpop.f32.mrb[0].mxu0
    %v835 = vadd.f32 %v761, %v834
    %v836 = vpop.f32.mrb[0].mxu0
    %837 = vdwg.mxu0
    %vm838 = vcmask 64512
    %v839 = vsel %vm838, %v835, -inf
    %840 = vmax.xlane.f32.xlu0 %v839
    %v841 = vpop.xlane.xlu0 %840
    %v842 = vsub.f32 %v835, %v841
    %v843 = vmul.f32 %v842, 1.442695
    %v844 = vpow.pop %v843
    %v845 = vsel %vm838, %v844, 0.0
    %846 = vadd.xlane.f32.xlu0 %v845
    %v847 = vpop.xlane.xlu0 %846
    %v848 = vlog2.pop %v847
    %v849 = vmul.f32 %v848, 0.6931472
    %v850 = vsub.f32 %v842, %v849
    %851 = vst.msk [vmem:[#allocation2] sm:$0xff] %vm838, %v850
    // Predicated region
    $region26: #{tpu_custom_call.1} parent=1 // pred_check
      _
    $region27: #{tpu_custom_call.1} parent=1 // pred_check_branch
      %853 = sbr.rel (0) target = $region29
    $region28: #{tpu_custom_call.1} parent=1 // pred_region
      %s855 = ssub.s32 128, 128
      %856 = vsyncadd [#allocation3], %s855
      %s858 = sshll.u32 [#allocation2], 4
      %s859 = int_to_ptr.vmem [resolvable:$true] %s858
      %861 = dma.vmem_to_hbm [thread:$0]  %s859, 128, %s6, [#allocation3]
    $region29: #{tpu_custom_call.1} parent=1 // pred_fallthru
      _
    // Predicated region
    $region30: #{tpu_custom_call.1} parent=1 // pred_check
      _
    $region31: #{tpu_custom_call.1} parent=1 // pred_check_branch
      %863 = sbr.rel (0) target = $region33
    $region32: #{tpu_custom_call.1} parent=1 // pred_region
      %864 = dma.done [#allocation3], 128
    $region33: #{tpu_custom_call.1} parent=1 // pred_fallthru
      _
    %865 = vsyncpa [#allocation3], 1

</llo_original>
